<compile_context>
chip_gen: v5e
topology: v5e:2x2
jax: 0.10.0
libtpu: 0.0.40
codegen_flags: <defaults>
</compile_context>

<pallas_src>
import jax
import jax.numpy as jnp
import numpy as np
from jax.experimental import pallas as pl
from jax.experimental.pallas import tpu as pltpu

GROUPS = 2


def make_critic_kernel(hidden):
    """Kernel closure over the (static) per-group hidden width."""

    def kernel(s_ref, a_ref, w1s_ref, w1a_ref, b1_ref, w2_ref, b2_ref, out_ref):
        # s_ref:   (TB, S_DIM)  f32 activation tile (batch-tiled)
        # a_ref:   (TB, A_DIM)  f32 activation tile (batch-tiled)
        # w1s_ref: (S_DIM, G*H) bf16  first-layer weights, states part
        # w1a_ref: (A_DIM, G*H) bf16  first-layer weights, actions part
        # b1_ref:  (1, G*H)     f32
        # w2_ref:  (1, G*H)     f32   flattened per-group second-layer weights
        # b2_ref:  (1, G)       f32
        # out_ref: (TB, 1)      f32
        s = s_ref[...].astype(jnp.bfloat16)   # VPU cast; HBM read stays f32
        a = a_ref[...].astype(jnp.bfloat16)

        # Split fused first layer: h = s @ W1[:S] + a @ W1[S:]  (no concat).
        h = jnp.dot(s, w1s_ref[...], preferred_element_type=jnp.float32)
        h = h + jnp.dot(a, w1a_ref[...], preferred_element_type=jnp.float32)
        h = jnp.maximum(h + b1_ref[...], 0.0)                      # (TB, G*H) f32

        # Second (per-group scalar) layer: elementwise multiply + lane-slice
        # reductions instead of a mostly-zero block-diagonal MXU matmul.
        hw = h * w2_ref[...]                                       # VPU
        q0 = jnp.sum(hw[:, :hidden], axis=-1, keepdims=True) + b2_ref[:, 0:1]
        q1 = jnp.sum(hw[:, hidden:2 * hidden], axis=-1, keepdims=True) + b2_ref[:, 1:2]

        # min over the G=2 group heads, then sigmoid.
        q_min = jnp.minimum(q0, q1)                                # (TB, 1)
        out_ref[...] = jax.nn.sigmoid(q_min)

    return kernel


def _pick_batch_tile(batch, cap=4096):
    """Largest multiple-of-8 divisor of `batch` (capped at 4096), preferring a
    tile that yields >= 2 grid steps so the "parallel" batch axis can be split
    across both TensorCores on v7x."""
    fallback = None
    for tb in range(min(cap, batch), 7, -1):
        if tb % 8 == 0 and batch % tb == 0:
            if batch // tb >= 2:
                return tb
            if fallback is None:
                fallback = tb          # divides, but grid == (1,)
    # Tiny / odd batches: full-batch block (equal-to-full-dim is always legal).
    return fallback if fallback is not None else batch


def prepare_params(params, state_dim):
    """One-time weight preprocessing (hoisted out of the per-call wrapper)."""
    w1, b1, w2, b2 = params            # (G,D,H), (G,H), (G,H), (G,1)
    G, D, H = w1.shape
    # Fuse the G heads: (G, D, H) -> (D, G*H); columns [g*H:(g+1)*H] = w1[g].
    w1_all = jnp.transpose(w1, (1, 0, 2)).reshape(D, G * H)
    w1_s = w1_all[:state_dim].astype(jnp.bfloat16)   # states part, bf16 MXU operand
    w1_a = w1_all[state_dim:].astype(jnp.bfloat16)   # actions part
    b1_all = b1.reshape(1, G * H).astype(jnp.float32)
    w2_row = w2.reshape(1, G * H).astype(jnp.float32)  # same group-major order as w1_all
    b2_row = b2.reshape(1, G).astype(jnp.float32)
    return w1_s, w1_a, b1_all, w2_row, b2_row


def critic_forward(states, actions, prepped, *, tile_b=None):
    w1_s, w1_a, b1_all, w2_row, b2_row = prepped
    B, s_dim = states.shape
    a_dim = actions.shape[1]
    gh = w1_s.shape[1]
    assert gh % GROUPS == 0
    H = gh // GROUPS
    assert w1_s.shape[0] == s_dim and w1_a.shape[0] == a_dim

    if tile_b is None:
        tile_b = _pick_batch_tile(B)
    assert B % tile_b == 0
    grid = (B // tile_b,)

    out = pl.pallas_call(
        make_critic_kernel(H),
        out_shape=jax.ShapeDtypeStruct((B, 1), jnp.float32),
        grid=grid,
        in_specs=[
            pl.BlockSpec((tile_b, s_dim), lambda i: (i, 0)),   # states: batch-tiled
            pl.BlockSpec((tile_b, a_dim), lambda i: (i, 0)),   # actions: batch-tiled
            pl.BlockSpec((s_dim, gh), lambda i: (0, 0)),       # weights stay VMEM-resident
            pl.BlockSpec((a_dim, gh), lambda i: (0, 0)),
            pl.BlockSpec((1, gh), lambda i: (0, 0)),
            pl.BlockSpec((1, gh), lambda i: (0, 0)),
            pl.BlockSpec((1, GROUPS), lambda i: (0, 0)),
        ],
        out_specs=pl.BlockSpec((tile_b, 1), lambda i: (i, 0)),
        compiler_params=pltpu.CompilerParams(
            dimension_semantics=("parallel",),                  # shard batch across TCs (v7x)
        ),
    )(states, actions, w1_s, w1_a, b1_all, w2_row, b2_row)

    # rearrange '... 1 -> ...'
    return out[:, 0]


def reference_forward(states, actions, params):
    """Pure-JAX f32 reference of the same math (per-group, unfused)."""
    w1, b1, w2, b2 = params
    x = jnp.concatenate([states, actions], axis=-1)
    qs = []
    for g in range(GROUPS):
        h = jnp.maximum(x @ w1[g] + b1[g], 0.0)
        qs.append(jnp.sum(h * w2[g], axis=-1, keepdims=True) + b2[g])
    q = jnp.minimum(qs[0], qs[1])[:, 0]
    return jax.nn.sigmoid(q)


def init_params(key, dim_in, dim_hidden):
    k1, k2, k3, k4 = jax.random.split(key, 4)
    w1 = jax.random.normal(k1, (GROUPS, dim_in, dim_hidden), jnp.float32) * 0.1
    b1 = jax.random.normal(k2, (GROUPS, dim_hidden), jnp.float32) * 0.01
    w2 = jax.random.normal(k3, (GROUPS, dim_hidden), jnp.float32) * 0.1
    b2 = jax.random.normal(k4, (GROUPS, 1), jnp.float32) * 0.01
    return w1, b1, w2, b2


if __name__ == "__main__":
    # Small-but-tileable shapes: batch=256 -> batch tile 128, grid=(2,),
    # state_dim=24, action_dim=8 -> D=32, hidden=32 (G*H = 64).
    B, S_DIM, A_DIM, HID = 256, 24, 8, 32
    key = jax.random.PRNGKey(0)
    ks, ka, kp = jax.random.split(key, 3)

    states = jax.random.normal(ks, (B, S_DIM), jnp.float32)
    actions = jax.random.normal(ka, (B, A_DIM), jnp.float32)
    params = init_params(kp, S_DIM + A_DIM, HID)

    prepped = prepare_params(params, S_DIM)          # one-time weight prep
    out = critic_forward(states, actions, prepped)
    out = jax.block_until_ready(out)

    ref = reference_forward(states, actions, params)
    # bf16 MXU operands -> relaxed tolerance vs the f32 reference.
    np.testing.assert_allclose(np.asarray(out), np.asarray(ref), rtol=2e-2, atol=2e-2)
    assert out.shape == (B,)

    print("KERNEL_OK")
</pallas_src>

<mosaic_0001>
module attributes {stable_mosaic.version = 11 : i64} {
  func.func @kernel(%arg0: i32, %arg1: memref<128x24xf32, #tpu.memory_space<vmem>>, %arg2: memref<128x8xf32, #tpu.memory_space<vmem>>, %arg3: memref<24x64xbf16, #tpu.memory_space<vmem>>, %arg4: memref<8x64xbf16, #tpu.memory_space<vmem>>, %arg5: memref<1x64xf32, #tpu.memory_space<vmem>>, %arg6: memref<1x64xf32, #tpu.memory_space<vmem>>, %arg7: memref<1x2xf32, #tpu.memory_space<vmem>>, %arg8: memref<128x1xf32, #tpu.memory_space<vmem>>) attributes {dimension_semantics = [#tpu.dimension_semantics<parallel>], iteration_bounds = array<i64: 2>, scalar_prefetch = 0 : i64, scratch_operands = 0 : i64, tpu.core_type = #tpu.core_type<tc>, window_params = [{transform_indices = @transform_0, window_bounds = array<i64: 128, 24>}, {transform_indices = @transform_1, window_bounds = array<i64: 128, 8>}, {pipeline_mode = #tpu.pipeline_mode<synchronous>, transform_indices = @transform_2, window_bounds = array<i64: 24, 64>}, {pipeline_mode = #tpu.pipeline_mode<synchronous>, transform_indices = @transform_3, window_bounds = array<i64: 8, 64>}, {pipeline_mode = #tpu.pipeline_mode<synchronous>, transform_indices = @transform_4, window_bounds = array<i64: 1, 64>}, {pipeline_mode = #tpu.pipeline_mode<synchronous>, transform_indices = @transform_5, window_bounds = array<i64: 1, 64>}, {pipeline_mode = #tpu.pipeline_mode<synchronous>, transform_indices = @transform_6, window_bounds = array<i64: 1, 2>}, {transform_indices = @transform_7, window_bounds = array<i64: 128, 1>}]} {
    %c0 = arith.constant 0 : index
    %c0_0 = arith.constant 0 : index
    %0 = vector.load %arg1[%c0, %c0_0] : memref<128x24xf32, #tpu.memory_space<vmem>>, vector<128x24xf32>
    %1 = arith.truncf %0 : vector<128x24xf32> to vector<128x24xbf16>
    %c0_1 = arith.constant 0 : index
    %c0_2 = arith.constant 0 : index
    %2 = vector.load %arg2[%c0_1, %c0_2] : memref<128x8xf32, #tpu.memory_space<vmem>>, vector<128x8xf32>
    %3 = arith.truncf %2 : vector<128x8xf32> to vector<128x8xbf16>
    %c0_3 = arith.constant 0 : index
    %c0_4 = arith.constant 0 : index
    %4 = vector.load %arg3[%c0_3, %c0_4] : memref<24x64xbf16, #tpu.memory_space<vmem>>, vector<24x64xbf16>
    %cst = arith.constant dense<0.000000e+00> : vector<128x64xf32>
    %5 = tpu.matmul %1, %4, %cst {dimension_numbers = #tpu.dot_dimension_numbers<[1], [0], [0], [1], [0, 0, 1, 1], [], []>} : vector<128x24xbf16>, vector<24x64xbf16>, vector<128x64xf32> -> vector<128x64xf32>
    %c0_5 = arith.constant 0 : index
    %c0_6 = arith.constant 0 : index
    %6 = vector.load %arg4[%c0_5, %c0_6] : memref<8x64xbf16, #tpu.memory_space<vmem>>, vector<8x64xbf16>
    %cst_7 = arith.constant dense<0.000000e+00> : vector<128x64xf32>
    %7 = tpu.matmul %3, %6, %cst_7 {dimension_numbers = #tpu.dot_dimension_numbers<[1], [0], [0], [1], [0, 0, 1, 1], [], []>} : vector<128x8xbf16>, vector<8x64xbf16>, vector<128x64xf32> -> vector<128x64xf32>
    %8 = arith.addf %5, %7 : vector<128x64xf32>
    %c0_8 = arith.constant 0 : index
    %c0_9 = arith.constant 0 : index
    %9 = vector.load %arg5[%c0_8, %c0_9] : memref<1x64xf32, #tpu.memory_space<vmem>>, vector<1x64xf32>
    %10 = vector.broadcast %9 : vector<1x64xf32> to vector<128x64xf32>
    %11 = arith.addf %8, %10 : vector<128x64xf32>
    %cst_10 = arith.constant 0.000000e+00 : f32
    %12 = vector.broadcast %cst_10 : f32 to vector<128x64xf32>
    %13 = arith.maximumf %11, %12 : vector<128x64xf32>
    %c0_11 = arith.constant 0 : index
    %c0_12 = arith.constant 0 : index
    %14 = vector.load %arg6[%c0_11, %c0_12] : memref<1x64xf32, #tpu.memory_space<vmem>>, vector<1x64xf32>
    %15 = vector.broadcast %14 : vector<1x64xf32> to vector<128x64xf32>
    %16 = arith.mulf %13, %15 : vector<128x64xf32>
    %17 = vector.extract_strided_slice %16 {offsets = [0, 0], sizes = [128, 32], strides = [1, 1]} : vector<128x64xf32> to vector<128x32xf32>
    %cst_13 = arith.constant dense<0.000000e+00> : vector<128xf32>
    %18 = vector.multi_reduction <add>, %17, %cst_13 [1] : vector<128x32xf32> to vector<128xf32>
    %19 = vector.shape_cast %18 : vector<128xf32> to vector<128x1xf32>
    %c0_14 = arith.constant 0 : index
    %c0_15 = arith.constant 0 : index
    %20 = vector.load %arg7[%c0_14, %c0_15] : memref<1x2xf32, #tpu.memory_space<vmem>>, vector<1x1xf32>
    %21 = vector.broadcast %20 : vector<1x1xf32> to vector<128x1xf32>
    %22 = arith.addf %19, %21 : vector<128x1xf32>
    %23 = vector.extract_strided_slice %16 {offsets = [0, 32], sizes = [128, 32], strides = [1, 1]} : vector<128x64xf32> to vector<128x32xf32>
    %cst_16 = arith.constant dense<0.000000e+00> : vector<128xf32>
    %24 = vector.multi_reduction <add>, %23, %cst_16 [1] : vector<128x32xf32> to vector<128xf32>
    %25 = vector.shape_cast %24 : vector<128xf32> to vector<128x1xf32>
    %c0_17 = arith.constant 0 : index
    %c1 = arith.constant 1 : index
    %26 = vector.load %arg7[%c0_17, %c1] : memref<1x2xf32, #tpu.memory_space<vmem>>, vector<1x1xf32>
    %27 = vector.broadcast %26 : vector<1x1xf32> to vector<128x1xf32>
    %28 = arith.addf %25, %27 : vector<128x1xf32>
    %29 = arith.minimumf %22, %28 : vector<128x1xf32>
    %30 = arith.negf %29 : vector<128x1xf32>
    %31 = math.exp %30 : vector<128x1xf32>
    %cst_18 = arith.constant 1.000000e+00 : f32
    %32 = vector.broadcast %cst_18 : f32 to vector<128x1xf32>
    %33 = arith.addf %32, %31 : vector<128x1xf32>
    %34 = arith.divf %32, %33 : vector<128x1xf32>
    %c0_19 = arith.constant 0 : index
    %c0_20 = arith.constant 0 : index
    %35 = vector.load %arg8[%c0_19, %c0_20] : memref<128x1xf32, #tpu.memory_space<vmem>>, vector<128x1xf32>
    tpu.vector_store %arg8[%c0_19, %c0_20], %34 {strides = array<i32>} : memref<128x1xf32, #tpu.memory_space<vmem>>, vector<128x1xf32>,
    return
  }
  func.func @transform_0(%arg0: i32) -> (i32, i32) {
    %c0_i32 = arith.constant 0 : i32
    %c0_i32_0 = arith.constant 0 : i32
    return %arg0, %c0_i32 : i32, i32
  }
  func.func @transform_1(%arg0: i32) -> (i32, i32) {
    %c0_i32 = arith.constant 0 : i32
    %c0_i32_0 = arith.constant 0 : i32
    return %arg0, %c0_i32 : i32, i32
  }
  func.func @transform_2(%arg0: i32) -> (i32, i32) {
    %c0_i32 = arith.constant 0 : i32
    %c0_i32_0 = arith.constant 0 : i32
    %c0_i32_1 = arith.constant 0 : i32
    return %c0_i32, %c0_i32_0 : i32, i32
  }
  func.func @transform_3(%arg0: i32) -> (i32, i32) {
    %c0_i32 = arith.constant 0 : i32
    %c0_i32_0 = arith.constant 0 : i32
    %c0_i32_1 = arith.constant 0 : i32
    return %c0_i32, %c0_i32_0 : i32, i32
  }
  func.func @transform_4(%arg0: i32) -> (i32, i32) {
    %c0_i32 = arith.constant 0 : i32
    %c0_i32_0 = arith.constant 0 : i32
    %c0_i32_1 = arith.constant 0 : i32
    return %c0_i32, %c0_i32_0 : i32, i32
  }
  func.func @transform_5(%arg0: i32) -> (i32, i32) {
    %c0_i32 = arith.constant 0 : i32
    %c0_i32_0 = arith.constant 0 : i32
    %c0_i32_1 = arith.constant 0 : i32
    return %c0_i32, %c0_i32_0 : i32, i32
  }
  func.func @transform_6(%arg0: i32) -> (i32, i32) {
    %c0_i32 = arith.constant 0 : i32
    %c0_i32_0 = arith.constant 0 : i32
    %c0_i32_1 = arith.constant 0 : i32
    return %c0_i32, %c0_i32_0 : i32, i32
  }
  func.func @transform_7(%arg0: i32) -> (i32, i32) {
    %c0_i32 = arith.constant 0 : i32
    %c0_i32_0 = arith.constant 0 : i32
    return %arg0, %c0_i32 : i32, i32
  }
}

</mosaic_0001>

<llo_original>
// kernel: tpu_custom_call.1
$region0: #{tpu_custom_call.1}
  #allocation0 [shape = 'u32[]', space=smem, size = 0x4, offset = 0x4, fixed_abs, tag = 'smem constant byte address 0x4 - core index']
  #allocation1 [shape = 'u32[72,128]{1,0:T(1,128)}', space=vmem, size = 0x9000, scoped, tag = 'internal scratch']
  %s0 = inlined_call_operand.vmem [shape: f32[256,24], index: 0, kind: input, shape index: {}]
  %s1 = inlined_call_operand.vmem [shape: f32[256,8], index: 1, kind: input, shape index: {}]
  %s2 = inlined_call_operand.vmem [shape: bf16[24,64], index: 2, kind: input, shape index: {}]
  %s3 = inlined_call_operand.vmem [shape: bf16[8,64], index: 3, kind: input, shape index: {}]
  %s4 = inlined_call_operand.vmem [shape: f32[1,64], index: 4, kind: input, shape index: {}]
  %s5 = inlined_call_operand.vmem [shape: f32[1,64], index: 5, kind: input, shape index: {}]
  %s6 = inlined_call_operand.vmem [shape: f32[1,2], index: 6, kind: input, shape index: {}]
  %s7 = inlined_call_operand.vmem [shape: f32[256,1], index: 7, kind: output, shape index: {}]
  %s8 = sld [smem:[#allocation0]]
  $region61: #{tpu_custom_call.1} parent=0
    _
  %s10 = ssub.s32 1, %s8
  %s11 = scalar_select 0, %s10, %s8
  loop: start=0, step=1, limit=4
  $region2: #{tpu_custom_call.1} parent=0 // loop_pre_header
    _
  $region3: #{tpu_custom_call.1} parent=0 // loop_header
    %s13 = sphi 0, %s17
    %p14 = scmp.ge.s32.totalorder %s13, 4
    %s23 = sphi 0, %s25
    %s26 = sphi 0, %s23
    %s27 = sphi 0, %s26
    %s43 = sphi 0, %s27
    %s49 = sphi 0, %s51
    %s52 = sphi 0, %s49
    %s53 = sphi 0, %s52
    %s69 = sphi 0, %s53
    %s73 = sphi 0, %s73
    %s75 = sphi 0, %s73
    %s76 = sphi 0, %s75
    %s90 = sphi 0, %s76
    %s94 = sphi 0, %s94
    %s96 = sphi 0, %s94
    %s97 = sphi 0, %s96
    %s111 = sphi 0, %s97
    %s115 = sphi 0, %s115
    %s117 = sphi 0, %s115
    %s118 = sphi 0, %s117
    %s132 = sphi 0, %s118
    %s136 = sphi 0, %s136
    %s138 = sphi 0, %s136
    %s139 = sphi 0, %s138
    %s153 = sphi 0, %s139
    %s157 = sphi 0, %s157
    %s159 = sphi 0, %s157
    %s160 = sphi 0, %s159
    %s174 = sphi 0, %s160
    %s180 = sphi 0, %s182
    %s183 = sphi 0, %s180
    %s184 = sphi 0, %s183
    %s200 = sphi 0, %s184
  $region4: #{tpu_custom_call.1} parent=0 // loop_header_branch
    %16 = sbr.rel (%p14) target = $region8
  $region5: #{tpu_custom_call.1} parent=0 // loop_body
    %s18 = ssub.s32 %s13, 1
    %s19 = ssub.s32 %s13, 2
    %s20 = sadd.s32 %s13, 1
    %s21 = ssub.s32 %s13, %s20
    %p22 = scmp.eq.s32.totalorder %s21, 0
    %s24 = sadd.s32 %s23, 1
    %s25 = scalar_select %p22, %s23, %s24
    %p28 = pneg %p22
    %p29 = scmp.eq.s32.totalorder %s13, 1
    %p30 = por %p28, %p29
    %p31 = scmp.ne.s32.totalorder %s23, %s26
    %p32 = scmp.eq.s32.totalorder %s13, 0
    %p33 = por %p31, %p32
    %p34 = scmp.ne.s32.totalorder %s23, %s26
    %p35 = scmp.eq.s32.totalorder %s18, 1
    %p36 = por %p34, %p35
    %p37 = scmp.ne.s32.totalorder %s26, %s27
    %p38 = scmp.eq.s32.totalorder %s18, 0
    %p39 = por %p37, %p38
    %p40 = scmp.ne.s32.totalorder %s26, %s27
    %p41 = scmp.eq.s32.totalorder %s19, 1
    %p42 = por %p40, %p41
    %p44 = scmp.ne.s32.totalorder %s27, %s43
    %p45 = scmp.eq.s32.totalorder %s19, 0
    %p46 = por %p44, %p45
    %s47 = ssub.s32 %s13, %s20
    %p48 = scmp.eq.s32.totalorder %s47, 0
    %s50 = sadd.s32 %s49, 1
    %s51 = scalar_select %p48, %s49, %s50
    %p54 = pneg %p48
    %p55 = scmp.eq.s32.totalorder %s13, 1
    %p56 = por %p54, %p55
    %p57 = scmp.ne.s32.totalorder %s49, %s52
    %p58 = scmp.eq.s32.totalorder %s13, 0
    %p59 = por %p57, %p58
    %p60 = scmp.ne.s32.totalorder %s49, %s52
    %p61 = scmp.eq.s32.totalorder %s18, 1
    %p62 = por %p60, %p61
    %p63 = scmp.ne.s32.totalorder %s52, %s53
    %p64 = scmp.eq.s32.totalorder %s18, 0
    %p65 = por %p63, %p64
    %p66 = scmp.ne.s32.totalorder %s52, %s53
    %p67 = scmp.eq.s32.totalorder %s19, 1
    %p68 = por %p66, %p67
    %p70 = scmp.ne.s32.totalorder %s53, %s69
    %p71 = scmp.eq.s32.totalorder %s19, 0
    %p72 = por %p70, %p71
    %s74 = sadd.s32 %s73, 1
    %p77 = scmp.eq.s32.totalorder %s13, 1
    %p78 = scmp.ne.s32.totalorder %s73, %s75
    %p79 = scmp.eq.s32.totalorder %s13, 0
    %p80 = por %p78, %p79
    %p81 = scmp.ne.s32.totalorder %s73, %s75
    %p82 = scmp.eq.s32.totalorder %s18, 1
    %p83 = por %p81, %p82
    %p84 = scmp.ne.s32.totalorder %s75, %s76
    %p85 = scmp.eq.s32.totalorder %s18, 0
    %p86 = por %p84, %p85
    %p87 = scmp.ne.s32.totalorder %s75, %s76
    %p88 = scmp.eq.s32.totalorder %s19, 1
    %p89 = por %p87, %p88
    %p91 = scmp.ne.s32.totalorder %s76, %s90
    %p92 = scmp.eq.s32.totalorder %s19, 0
    %p93 = por %p91, %p92
    %s95 = sadd.s32 %s94, 1
    %p98 = scmp.eq.s32.totalorder %s13, 1
    %p99 = scmp.ne.s32.totalorder %s94, %s96
    %p100 = scmp.eq.s32.totalorder %s13, 0
    %p101 = por %p99, %p100
    %p102 = scmp.ne.s32.totalorder %s94, %s96
    %p103 = scmp.eq.s32.totalorder %s18, 1
    %p104 = por %p102, %p103
    %p105 = scmp.ne.s32.totalorder %s96, %s97
    %p106 = scmp.eq.s32.totalorder %s18, 0
    %p107 = por %p105, %p106
    %p108 = scmp.ne.s32.totalorder %s96, %s97
    %p109 = scmp.eq.s32.totalorder %s19, 1
    %p110 = por %p108, %p109
    %p112 = scmp.ne.s32.totalorder %s97, %s111
    %p113 = scmp.eq.s32.totalorder %s19, 0
    %p114 = por %p112, %p113
    %s116 = sadd.s32 %s115, 1
    %p119 = scmp.eq.s32.totalorder %s13, 1
    %p120 = scmp.ne.s32.totalorder %s115, %s117
    %p121 = scmp.eq.s32.totalorder %s13, 0
    %p122 = por %p120, %p121
    %p123 = scmp.ne.s32.totalorder %s115, %s117
    %p124 = scmp.eq.s32.totalorder %s18, 1
    %p125 = por %p123, %p124
    %p126 = scmp.ne.s32.totalorder %s117, %s118
    %p127 = scmp.eq.s32.totalorder %s18, 0
    %p128 = por %p126, %p127
    %p129 = scmp.ne.s32.totalorder %s117, %s118
    %p130 = scmp.eq.s32.totalorder %s19, 1
    %p131 = por %p129, %p130
    %p133 = scmp.ne.s32.totalorder %s118, %s132
    %p134 = scmp.eq.s32.totalorder %s19, 0
    %p135 = por %p133, %p134
    %s137 = sadd.s32 %s136, 1
    %p140 = scmp.eq.s32.totalorder %s13, 1
    %p141 = scmp.ne.s32.totalorder %s136, %s138
    %p142 = scmp.eq.s32.totalorder %s13, 0
    %p143 = por %p141, %p142
    %p144 = scmp.ne.s32.totalorder %s136, %s138
    %p145 = scmp.eq.s32.totalorder %s18, 1
    %p146 = por %p144, %p145
    %p147 = scmp.ne.s32.totalorder %s138, %s139
    %p148 = scmp.eq.s32.totalorder %s18, 0
    %p149 = por %p147, %p148
    %p150 = scmp.ne.s32.totalorder %s138, %s139
    %p151 = scmp.eq.s32.totalorder %s19, 1
    %p152 = por %p150, %p151
    %p154 = scmp.ne.s32.totalorder %s139, %s153
    %p155 = scmp.eq.s32.totalorder %s19, 0
    %p156 = por %p154, %p155
    %s158 = sadd.s32 %s157, 1
    %p161 = scmp.eq.s32.totalorder %s13, 1
    %p162 = scmp.ne.s32.totalorder %s157, %s159
    %p163 = scmp.eq.s32.totalorder %s13, 0
    %p164 = por %p162, %p163
    %p165 = scmp.ne.s32.totalorder %s157, %s159
    %p166 = scmp.eq.s32.totalorder %s18, 1
    %p167 = por %p165, %p166
    %p168 = scmp.ne.s32.totalorder %s159, %s160
    %p169 = scmp.eq.s32.totalorder %s18, 0
    %p170 = por %p168, %p169
    %p171 = scmp.ne.s32.totalorder %s159, %s160
    %p172 = scmp.eq.s32.totalorder %s19, 1
    %p173 = por %p171, %p172
    %p175 = scmp.ne.s32.totalorder %s160, %s174
    %p176 = scmp.eq.s32.totalorder %s19, 0
    %p177 = por %p175, %p176
    %s178 = ssub.s32 %s13, %s20
    %p179 = scmp.eq.s32.totalorder %s178, 0
    %s181 = sadd.s32 %s180, 1
    %s182 = scalar_select %p179, %s180, %s181
    %p185 = pneg %p179
    %p186 = scmp.eq.s32.totalorder %s13, 1
    %p187 = por %p185, %p186
    %p188 = scmp.ne.s32.totalorder %s180, %s183
    %p189 = scmp.eq.s32.totalorder %s13, 0
    %p190 = por %p188, %p189
    %p191 = scmp.ne.s32.totalorder %s180, %s183
    %p192 = scmp.eq.s32.totalorder %s18, 1
    %p193 = por %p191, %p192
    %p194 = scmp.ne.s32.totalorder %s183, %s184
    %p195 = scmp.eq.s32.totalorder %s18, 0
    %p196 = por %p194, %p195
    %p197 = scmp.ne.s32.totalorder %s183, %s184
    %p198 = scmp.eq.s32.totalorder %s19, 1
    %p199 = por %p197, %p198
    %p201 = scmp.ne.s32.totalorder %s184, %s200
    %p202 = scmp.eq.s32.totalorder %s19, 0
    %p203 = por %p201, %p202
    %p204 = scmp.le.s32.totalorder 1, %s13
    %p205 = scmp.lt.s32.totalorder %s13, 3
    %p206 = pnand %p204, %p205
    %p207 = pneg %p206
    // Predicated region
    $region9: #{tpu_custom_call.1} parent=5 // pred_check
      _
    $region10: #{tpu_custom_call.1} parent=5 // pred_check_branch
      %209 = sbr.rel (%p206) target = $region12
    $region11: #{tpu_custom_call.1} parent=5 // pred_region
      %s210 = ssub.s32 %s13, 1
      // Predicated region
      $region13: #{tpu_custom_call.1} parent=11 // pred_check
        %p211 = pneg %p86
      $region14: #{tpu_custom_call.1} parent=11 // pred_check_branch
        %213 = sbr.rel (%p211) target = $region16
      $region15: #{tpu_custom_call.1} parent=11 // pred_region
        _
      $region16: #{tpu_custom_call.1} parent=11 // pred_fallthru
        _
      // Predicated region
      $region17: #{tpu_custom_call.1} parent=11 // pred_check
        %p214 = pneg %p107
      $region18: #{tpu_custom_call.1} parent=11 // pred_check_branch
        %216 = sbr.rel (%p214) target = $region20
      $region19: #{tpu_custom_call.1} parent=11 // pred_region
        _
      $region20: #{tpu_custom_call.1} parent=11 // pred_fallthru
        _
      // Predicated region
      $region21: #{tpu_custom_call.1} parent=11 // pred_check
        %p217 = pneg %p128
      $region22: #{tpu_custom_call.1} parent=11 // pred_check_branch
        %219 = sbr.rel (%p217) target = $region24
      $region23: #{tpu_custom_call.1} parent=11 // pred_region
        _
      $region24: #{tpu_custom_call.1} parent=11 // pred_fallthru
        _
      // Predicated region
      $region25: #{tpu_custom_call.1} parent=11 // pred_check
        %p220 = pneg %p149
      $region26: #{tpu_custom_call.1} parent=11 // pred_check_branch
        %222 = sbr.rel (%p220) target = $region28
      $region27: #{tpu_custom_call.1} parent=11 // pred_region
        _
      $region28: #{tpu_custom_call.1} parent=11 // pred_fallthru
        _
      // Predicated region
      $region29: #{tpu_custom_call.1} parent=11 // pred_check
        %p223 = pneg %p170
      $region30: #{tpu_custom_call.1} parent=11 // pred_check_branch
        %225 = sbr.rel (%p223) target = $region32
      $region31: #{tpu_custom_call.1} parent=11 // pred_region
        _
      $region32: #{tpu_custom_call.1} parent=11 // pred_fallthru
        _
    $region12: #{tpu_custom_call.1} parent=5 // pred_fallthru
      _
    %p226 = scmp.lt.s32.totalorder %s13, 2
    // Predicated region
    $region33: #{tpu_custom_call.1} parent=5 // pred_check
      %p227 = pneg %p226
    $region34: #{tpu_custom_call.1} parent=5 // pred_check_branch
      %229 = sbr.rel (%p227) target = $region36
    $region35: #{tpu_custom_call.1} parent=5 // pred_region
      // Predicated region
      $region37: #{tpu_custom_call.1} parent=35 // pred_check
        %p230 = pneg %p33
      $region38: #{tpu_custom_call.1} parent=35 // pred_check_branch
        %232 = sbr.rel (%p230) target = $region40
      $region39: #{tpu_custom_call.1} parent=35 // pred_region
        %s233 = smul.u32 16, %s13
        %p234 = scmp.lt.s32.totalorder %s233, 31
        %s235 = scalar_select %p234, %s233, 31
        %s236 = smul.addr %s235, 8
        %s237 = scalar_lea.vmem %s0, %s236
        %s238 = smul.u32 16, %s13
      $region40: #{tpu_custom_call.1} parent=35 // pred_fallthru
        _
      // Predicated region
      $region41: #{tpu_custom_call.1} parent=35 // pred_check
        %p239 = pneg %p59
      $region42: #{tpu_custom_call.1} parent=35 // pred_check_branch
        %241 = sbr.rel (%p239) target = $region44
      $region43: #{tpu_custom_call.1} parent=35 // pred_region
        %s242 = smul.u32 16, %s13
        %p243 = scmp.lt.s32.totalorder %s242, 31
        %s244 = scalar_select %p243, %s242, 31
        %s245 = smul.addr %s244, 8
        %s246 = scalar_lea.vmem %s1, %s245
        %s247 = smul.u32 16, %s13
      $region44: #{tpu_custom_call.1} parent=35 // pred_fallthru
        _
    $region36: #{tpu_custom_call.1} parent=5 // pred_fallthru
      _
    %p248 = scmp.le.s32.totalorder 1, %s13
    %p249 = scmp.lt.s32.totalorder %s13, 3
    %p250 = pnand %p248, %p249
    %p251 = pneg %p250
    // Predicated region
    $region45: #{tpu_custom_call.1} parent=5 // pred_check
      _
    $region46: #{tpu_custom_call.1} parent=5 // pred_check_branch
      %253 = sbr.rel (%p250) target = $region48
    $region47: #{tpu_custom_call.1} parent=5 // pred_region
      %s254 = ssub.s32 %s13, 1
      %s255 = smul.u32 16, %s18
      %p256 = scmp.lt.s32.totalorder %s255, 31
      %s257 = scalar_select %p256, %s255, 31
      %s258 = smul.addr %s257, 8
      %s259 = scalar_lea.vmem %s0, %s258
      %p260 = pneg %p39
      %p261 = pneg %p36
      %s262 = smul.u32 16, %s18
      %p263 = scmp.lt.s32.totalorder %s262, 31
      %s264 = scalar_select %p263, %s262, 31
      %s265 = smul.addr %s264, 8
      %s266 = scalar_lea.vmem %s1, %s265
      %p267 = pneg %p65
      %p268 = pneg %p62
      %p269 = pneg %p86
      %p270 = pneg %p83
      %p271 = pneg %p107
      %p272 = pneg %p104
      %p273 = pneg %p128
      %p274 = pneg %p125
      %p275 = pneg %p149
      %p276 = pneg %p146
      %p277 = pneg %p170
      %p278 = pneg %p167
      %p279 = pneg %p196
      %p280 = pneg %p193
      %s281 = smul.u32 16, %s18
      %p282 = scmp.lt.s32.totalorder %s281, 31
      %s283 = scalar_select %p282, %s281, 31
      %s284 = smul.addr %s283, 8
      %s285 = scalar_lea.vmem %s7, %s284
      %s286 = smul.u32 16, %s18
      %p287 = scmp.lt.s32.totalorder %s286, 31
      %s288 = scalar_select %p287, %s286, 31
      %s289 = smul.addr %s288, 8
      %s290 = scalar_lea.vmem %s0, %s289
      %s291 = smul.u32 16, %s18
      %s292 = smul.u32 16, %s18
      %p293 = scmp.lt.s32.totalorder %s292, 31
      %s294 = scalar_select %p293, %s292, 31
      %s295 = smul.addr %s294, 8
      %s296 = scalar_lea.vmem %s1, %s295
      %s297 = smul.u32 16, %s18
      %s298 = smul.u32 16, %s18
      %p299 = scmp.lt.s32.totalorder %s298, 31
      %s300 = scalar_select %p299, %s298, 31
      %s301 = smul.addr %s300, 8
      %s302 = scalar_lea.vmem %s7, %s301
      %s303 = smul.u32 16, %s18
      %v305 = vld [vmem:[%s290] sm:$0xff]
      %v306 = vld [vmem:[%s290 + $0x8] sm:$0xff]
      %v307 = vld [vmem:[%s290 + $0x10] sm:$0xff]
      %v308 = vld [vmem:[%s290 + $0x18] sm:$0xff]
      %v309 = vld [vmem:[%s290 + $0x20] sm:$0xff]
      %v310 = vld [vmem:[%s290 + $0x28] sm:$0xff]
      %v311 = vld [vmem:[%s290 + $0x30] sm:$0xff]
      %v312 = vld [vmem:[%s290 + $0x38] sm:$0xff]
      %v313 = vld [vmem:[%s290 + $0x40] sm:$0xff]
      %v314 = vld [vmem:[%s290 + $0x48] sm:$0xff]
      %v315 = vld [vmem:[%s290 + $0x50] sm:$0xff]
      %v316 = vld [vmem:[%s290 + $0x58] sm:$0xff]
      %v317 = vld [vmem:[%s290 + $0x60] sm:$0xff]
      %v318 = vld [vmem:[%s290 + $0x68] sm:$0xff]
      %v319 = vld [vmem:[%s290 + $0x70] sm:$0xff]
      %v320 = vld [vmem:[%s290 + $0x78] sm:$0xff]
      %v321 = vpack.c.bf16 %v306, %v305
      %v322 = vpack.c.bf16 %v308, %v307
      %v323 = vpack.c.bf16 %v310, %v309
      %v324 = vpack.c.bf16 %v312, %v311
      %v325 = vpack.c.bf16 %v314, %v313
      %v326 = vpack.c.bf16 %v316, %v315
      %v327 = vpack.c.bf16 %v318, %v317
      %v328 = vpack.c.bf16 %v320, %v319
      %v329 = vld [vmem:[%s296] sm:$0xff]
      %v330 = vld [vmem:[%s296 + $0x8] sm:$0xff]
      %v331 = vld [vmem:[%s296 + $0x10] sm:$0xff]
      %v332 = vld [vmem:[%s296 + $0x18] sm:$0xff]
      %v333 = vld [vmem:[%s296 + $0x20] sm:$0xff]
      %v334 = vld [vmem:[%s296 + $0x28] sm:$0xff]
      %v335 = vld [vmem:[%s296 + $0x30] sm:$0xff]
      %v336 = vld [vmem:[%s296 + $0x38] sm:$0xff]
      %v337 = vld [vmem:[%s296 + $0x40] sm:$0xff]
      %v338 = vld [vmem:[%s296 + $0x48] sm:$0xff]
      %v339 = vld [vmem:[%s296 + $0x50] sm:$0xff]
      %v340 = vld [vmem:[%s296 + $0x58] sm:$0xff]
      %v341 = vld [vmem:[%s296 + $0x60] sm:$0xff]
      %v342 = vld [vmem:[%s296 + $0x68] sm:$0xff]
      %v343 = vld [vmem:[%s296 + $0x70] sm:$0xff]
      %v344 = vld [vmem:[%s296 + $0x78] sm:$0xff]
      %v345 = vpack.c.bf16 %v330, %v329
      %v346 = vpack.c.bf16 %v332, %v331
      %v347 = vpack.c.bf16 %v334, %v333
      %v348 = vpack.c.bf16 %v336, %v335
      %v349 = vpack.c.bf16 %v338, %v337
      %v350 = vpack.c.bf16 %v340, %v339
      %v351 = vpack.c.bf16 %v342, %v341
      %v352 = vpack.c.bf16 %v344, %v343
      %v353 = vld [vmem:[%s2] sm:$0xf]
      %v354 = vld [vmem:[%s2 + $0x4] sm:$0xf]
      %v355 = vld [vmem:[%s2 + $0x8] sm:$0xf]
      %v356 = vld [vmem:[%s3] sm:$0xf]
      %vm357 = vcmask 64512
      %v359 = vsel %vm357, %v345, 0
      %v362 = vsel %vm357, %v346, 0
      %v365 = vsel %vm357, %v347, 0
      %v368 = vsel %vm357, %v348, 0
      %v371 = vsel %vm357, %v349, 0
      %v374 = vsel %vm357, %v350, 0
      %v377 = vsel %vm357, %v351, 0
      %v380 = vsel %vm357, %v352, 0
      %vm382 = vcmask 1043456
      %v384 = vsel %vm382, %v356, 0
      %386 = vmatpush.bf16.msra.mxu0 0
      %387 = vmatpush.bf16.msra.mxu0 0
      %388 = vmatpush.bf16.msra.mxu0 0
      %389 = vmatpush.bf16.msra.mxu0 0
      %390 = vmatpush.bf16.msra.mxu0 0
      %391 = vmatpush.bf16.msra.mxu0 0
      %392 = vmatpush.bf16.msra.mxu0 0
      %393 = vmatpush.bf16.msra.mxu0 %v384
      %394 = vmatmul.bf16.gmra.mxu0 %v359
      %v395 = vpop.f32.mrf.mxu0
      %v396 = vadd.f32 0.0, %v395
      %v397 = vpop.f32.mrf.mxu0
      %v398 = vadd.f32 0.0, %v397
      %399 = vmatmul.bf16.gmra.mxu0 %v362
      %v400 = vpop.f32.mrf.mxu0
      %v401 = vadd.f32 0.0, %v400
      %v402 = vpop.f32.mrf.mxu0
      %v403 = vadd.f32 0.0, %v402
      %404 = vmatmul.bf16.gmra.mxu0 %v365
      %v405 = vpop.f32.mrf.mxu0
      %v406 = vadd.f32 0.0, %v405
      %v407 = vpop.f32.mrf.mxu0
      %v408 = vadd.f32 0.0, %v407
      %409 = vmatmul.bf16.gmra.mxu0 %v368
      %v410 = vpop.f32.mrf.mxu0
      %v411 = vadd.f32 0.0, %v410
      %v412 = vpop.f32.mrf.mxu0
      %v413 = vadd.f32 0.0, %v412
      %414 = vmatmul.bf16.gmra.mxu0 %v371
      %v415 = vpop.f32.mrf.mxu0
      %v416 = vadd.f32 0.0, %v415
      %v417 = vpop.f32.mrf.mxu0
      %v418 = vadd.f32 0.0, %v417
      %419 = vmatmul.bf16.gmra.mxu0 %v374
      %v420 = vpop.f32.mrf.mxu0
      %v421 = vadd.f32 0.0, %v420
      %v422 = vpop.f32.mrf.mxu0
      %v423 = vadd.f32 0.0, %v422
      %424 = vmatmul.bf16.gmra.mxu0 %v377
      %v425 = vpop.f32.mrf.mxu0
      %v426 = vadd.f32 0.0, %v425
      %v427 = vpop.f32.mrf.mxu0
      %v428 = vadd.f32 0.0, %v427
      %429 = vmatmul.bf16.gmra.mxu0 %v380
      %v430 = vpop.f32.mrf.mxu0
      %v431 = vadd.f32 0.0, %v430
      %v432 = vpop.f32.mrf.mxu0
      %v433 = vadd.f32 0.0, %v432
      %434 = vdwg.mxu0
      %v438 = vunpack.c.l.b16 %v353
      %v439 = vunpack.c.l.b16 %v354
      %v440 = vunpack.c.l.b16 %v355
      %v441 = vpack.c.b16 %v439, %v438
      %v442 = vpack.c.b16 %v440, %v440
      %vm444 = vcmask 195584
      %v446 = vsel %vm444, %v321, 0
      %v449 = vsel %vm444, %v322, 0
      %v452 = vsel %vm444, %v323, 0
      %v455 = vsel %vm444, %v324, 0
      %v458 = vsel %vm444, %v325, 0
      %v461 = vsel %vm444, %v326, 0
      %v464 = vsel %vm444, %v327, 0
      %v467 = vsel %vm444, %v328, 0
      %v470 = vsel %vm382, %v442, 0
      %472 = vmatpush.bf16.msra.mxu0 0
      %473 = vmatpush.bf16.msra.mxu0 0
      %474 = vmatpush.bf16.msra.mxu0 0
      %475 = vmatpush.bf16.msra.mxu0 0
      %476 = vmatpush.bf16.msra.mxu0 0
      %477 = vmatpush.bf16.msra.mxu0 0
      %478 = vmatpush.bf16.msra.mxu0 %v470
      %479 = vmatpush.bf16.msra.mxu0 %v441
      %480 = vmatmul.bf16.gmra.mxu0 %v446
      %v481 = vpop.f32.mrf.mxu0
      %v482 = vadd.f32 %v396, %v481
      %v483 = vpop.f32.mrf.mxu0
      %v484 = vadd.f32 %v398, %v483
      %485 = vmatmul.bf16.gmra.mxu0 %v449
      %v486 = vpop.f32.mrf.mxu0
      %v487 = vadd.f32 %v401, %v486
      %v488 = vpop.f32.mrf.mxu0
      %v489 = vadd.f32 %v403, %v488
      %490 = vmatmul.bf16.gmra.mxu0 %v452
      %v491 = vpop.f32.mrf.mxu0
      %v492 = vadd.f32 %v406, %v491
      %v493 = vpop.f32.mrf.mxu0
      %v494 = vadd.f32 %v408, %v493
      %495 = vmatmul.bf16.gmra.mxu0 %v455
      %v496 = vpop.f32.mrf.mxu0
      %v497 = vadd.f32 %v411, %v496
      %v498 = vpop.f32.mrf.mxu0
      %v499 = vadd.f32 %v413, %v498
      %500 = vmatmul.bf16.gmra.mxu0 %v458
      %v501 = vpop.f32.mrf.mxu0
      %v502 = vadd.f32 %v416, %v501
      %v503 = vpop.f32.mrf.mxu0
      %v504 = vadd.f32 %v418, %v503
      %505 = vmatmul.bf16.gmra.mxu0 %v461
      %v506 = vpop.f32.mrf.mxu0
      %v507 = vadd.f32 %v421, %v506
      %v508 = vpop.f32.mrf.mxu0
      %v509 = vadd.f32 %v423, %v508
      %510 = vmatmul.bf16.gmra.mxu0 %v464
      %v511 = vpop.f32.mrf.mxu0
      %v512 = vadd.f32 %v426, %v511
      %v513 = vpop.f32.mrf.mxu0
      %v514 = vadd.f32 %v428, %v513
      %515 = vmatmul.bf16.gmra.mxu0 %v467
      %v516 = vpop.f32.mrf.mxu0
      %v517 = vadd.f32 %v431, %v516
      %v518 = vpop.f32.mrf.mxu0
      %v519 = vadd.f32 %v433, %v518
      %520 = vdwg.mxu0
      %v521 = vld [vmem:[%s4] sm:$0x1]
      %v523 = vperm.slane %v521, 0
      %v525 = vadd.f32 %v482, %v523
      %v526 = vadd.f32 %v484, %v523
      %v527 = vadd.f32 %v487, %v523
      %v528 = vadd.f32 %v489, %v523
      %v529 = vadd.f32 %v492, %v523
      %v530 = vadd.f32 %v494, %v523
      %v531 = vadd.f32 %v497, %v523
      %v532 = vadd.f32 %v499, %v523
      %v533 = vadd.f32 %v502, %v523
      %v534 = vadd.f32 %v504, %v523
      %v535 = vadd.f32 %v507, %v523
      %v536 = vadd.f32 %v509, %v523
      %v537 = vadd.f32 %v512, %v523
      %v538 = vadd.f32 %v514, %v523
      %v539 = vadd.f32 %v517, %v523
      %v540 = vadd.f32 %v519, %v523
      %v541 = vmax.f32 %v525, 0.0
      %v542 = vmax.f32 %v526, 0.0
      %v543 = vmax.f32 %v527, 0.0
      %v544 = vmax.f32 %v528, 0.0
      %v545 = vmax.f32 %v529, 0.0
      %v546 = vmax.f32 %v530, 0.0
      %v547 = vmax.f32 %v531, 0.0
      %v548 = vmax.f32 %v532, 0.0
      %v549 = vmax.f32 %v533, 0.0
      %v550 = vmax.f32 %v534, 0.0
      %v551 = vmax.f32 %v535, 0.0
      %v552 = vmax.f32 %v536, 0.0
      %v553 = vmax.f32 %v537, 0.0
      %v554 = vmax.f32 %v538, 0.0
      %v555 = vmax.f32 %v539, 0.0
      %v556 = vmax.f32 %v540, 0.0
      %v557 = vld [vmem:[%s5] sm:$0x1]
      %v559 = vperm.slane %v557, 0
      %v561 = vmul.f32 %v541, %v559
      %v562 = vmul.f32 %v542, %v559
      %v563 = vmul.f32 %v543, %v559
      %v564 = vmul.f32 %v544, %v559
      %v565 = vmul.f32 %v545, %v559
      %v566 = vmul.f32 %v546, %v559
      %v567 = vmul.f32 %v547, %v559
      %v568 = vmul.f32 %v548, %v559
      %v569 = vmul.f32 %v549, %v559
      %v570 = vmul.f32 %v550, %v559
      %v571 = vmul.f32 %v551, %v559
      %v572 = vmul.f32 %v552, %v559
      %v573 = vmul.f32 %v553, %v559
      %v574 = vmul.f32 %v554, %v559
      %v575 = vmul.f32 %v555, %v559
      %v576 = vmul.f32 %v556, %v559
      %vm577 = vcmask 261120
      %v578 = vsel %vm577, %v561, 0.0
      %579 = vadd.xlane.f32.xlu0 %v578
      %v580 = vpop.xlane.xlu0 %579
      %v581 = vsel %vm577, %v562, 0.0
      %582 = vadd.xlane.f32.xlu0 %v581
      %v583 = vpop.xlane.xlu0 %582
      %v584 = vsel %vm577, %v563, 0.0
      %585 = vadd.xlane.f32.xlu0 %v584
      %v586 = vpop.xlane.xlu0 %585
      %v587 = vsel %vm577, %v564, 0.0
      %588 = vadd.xlane.f32.xlu0 %v587
      %v589 = vpop.xlane.xlu0 %588
      %v590 = vsel %vm577, %v565, 0.0
      %591 = vadd.xlane.f32.xlu0 %v590
      %v592 = vpop.xlane.xlu0 %591
      %v593 = vsel %vm577, %v566, 0.0
      %594 = vadd.xlane.f32.xlu0 %v593
      %v595 = vpop.xlane.xlu0 %594
      %v596 = vsel %vm577, %v567, 0.0
      %597 = vadd.xlane.f32.xlu0 %v596
      %v598 = vpop.xlane.xlu0 %597
      %v599 = vsel %vm577, %v568, 0.0
      %600 = vadd.xlane.f32.xlu0 %v599
      %v601 = vpop.xlane.xlu0 %600
      %v602 = vsel %vm577, %v569, 0.0
      %603 = vadd.xlane.f32.xlu0 %v602
      %v604 = vpop.xlane.xlu0 %603
      %v605 = vsel %vm577, %v570, 0.0
      %606 = vadd.xlane.f32.xlu0 %v605
      %v607 = vpop.xlane.xlu0 %606
      %v608 = vsel %vm577, %v571, 0.0
      %609 = vadd.xlane.f32.xlu0 %v608
      %v610 = vpop.xlane.xlu0 %609
      %v611 = vsel %vm577, %v572, 0.0
      %612 = vadd.xlane.f32.xlu0 %v611
      %v613 = vpop.xlane.xlu0 %612
      %v614 = vsel %vm577, %v573, 0.0
      %615 = vadd.xlane.f32.xlu0 %v614
      %v616 = vpop.xlane.xlu0 %615
      %v617 = vsel %vm577, %v574, 0.0
      %618 = vadd.xlane.f32.xlu0 %v617
      %v619 = vpop.xlane.xlu0 %618
      %v620 = vsel %vm577, %v575, 0.0
      %621 = vadd.xlane.f32.xlu0 %v620
      %v622 = vpop.xlane.xlu0 %621
      %v623 = vsel %vm577, %v576, 0.0
      %624 = vadd.xlane.f32.xlu0 %v623
      %v625 = vpop.xlane.xlu0 %624
      %v626 = vld [vmem:[%s6] sm:$0x1]
      %v628 = vperm.slane %v626, 0
      %v630 = vadd.f32 %v580, %v628
      %v631 = vadd.f32 %v583, %v628
      %v632 = vadd.f32 %v586, %v628
      %v633 = vadd.f32 %v589, %v628
      %v634 = vadd.f32 %v592, %v628
      %v635 = vadd.f32 %v595, %v628
      %v636 = vadd.f32 %v598, %v628
      %v637 = vadd.f32 %v601, %v628
      %v638 = vadd.f32 %v604, %v628
      %v639 = vadd.f32 %v607, %v628
      %v640 = vadd.f32 %v610, %v628
      %v641 = vadd.f32 %v613, %v628
      %v642 = vadd.f32 %v616, %v628
      %v643 = vadd.f32 %v619, %v628
      %v644 = vadd.f32 %v622, %v628
      %v645 = vadd.f32 %v625, %v628
      %662 = vrot.lane.b32.xlu0 %v561, 96
      %v663 = vpop.permute.xlu0 %662
      %664 = vrot.lane.b32.xlu0 %v562, 96
      %v665 = vpop.permute.xlu0 %664
      %666 = vrot.lane.b32.xlu0 %v563, 96
      %v667 = vpop.permute.xlu0 %666
      %668 = vrot.lane.b32.xlu0 %v564, 96
      %v669 = vpop.permute.xlu0 %668
      %670 = vrot.lane.b32.xlu0 %v565, 96
      %v671 = vpop.permute.xlu0 %670
      %672 = vrot.lane.b32.xlu0 %v566, 96
      %v673 = vpop.permute.xlu0 %672
      %674 = vrot.lane.b32.xlu0 %v567, 96
      %v675 = vpop.permute.xlu0 %674
      %676 = vrot.lane.b32.xlu0 %v568, 96
      %v677 = vpop.permute.xlu0 %676
      %678 = vrot.lane.b32.xlu0 %v569, 96
      %v679 = vpop.permute.xlu0 %678
      %680 = vrot.lane.b32.xlu0 %v570, 96
      %v681 = vpop.permute.xlu0 %680
      %682 = vrot.lane.b32.xlu0 %v571, 96
      %v683 = vpop.permute.xlu0 %682
      %684 = vrot.lane.b32.xlu0 %v572, 96
      %v685 = vpop.permute.xlu0 %684
      %686 = vrot.lane.b32.xlu0 %v573, 96
      %v687 = vpop.permute.xlu0 %686
      %688 = vrot.lane.b32.xlu0 %v574, 96
      %v689 = vpop.permute.xlu0 %688
      %690 = vrot.lane.b32.xlu0 %v575, 96
      %v691 = vpop.permute.xlu0 %690
      %692 = vrot.lane.b32.xlu0 %v576, 96
      %v693 = vpop.permute.xlu0 %692
      %v710 = vsel %vm577, %v663, 0.0
      %711 = vadd.xlane.f32.xlu0 %v710
      %v712 = vpop.xlane.xlu0 %711
      %v713 = vsel %vm577, %v665, 0.0
      %714 = vadd.xlane.f32.xlu0 %v713
      %v715 = vpop.xlane.xlu0 %714
      %v716 = vsel %vm577, %v667, 0.0
      %717 = vadd.xlane.f32.xlu0 %v716
      %v718 = vpop.xlane.xlu0 %717
      %v719 = vsel %vm577, %v669, 0.0
      %720 = vadd.xlane.f32.xlu0 %v719
      %v721 = vpop.xlane.xlu0 %720
      %v722 = vsel %vm577, %v671, 0.0
      %723 = vadd.xlane.f32.xlu0 %v722
      %v724 = vpop.xlane.xlu0 %723
      %v725 = vsel %vm577, %v673, 0.0
      %726 = vadd.xlane.f32.xlu0 %v725
      %v727 = vpop.xlane.xlu0 %726
      %v728 = vsel %vm577, %v675, 0.0
      %729 = vadd.xlane.f32.xlu0 %v728
      %v730 = vpop.xlane.xlu0 %729
      %v731 = vsel %vm577, %v677, 0.0
      %732 = vadd.xlane.f32.xlu0 %v731
      %v733 = vpop.xlane.xlu0 %732
      %v734 = vsel %vm577, %v679, 0.0
      %735 = vadd.xlane.f32.xlu0 %v734
      %v736 = vpop.xlane.xlu0 %735
      %v737 = vsel %vm577, %v681, 0.0
      %738 = vadd.xlane.f32.xlu0 %v737
      %v739 = vpop.xlane.xlu0 %738
      %v740 = vsel %vm577, %v683, 0.0
      %741 = vadd.xlane.f32.xlu0 %v740
      %v742 = vpop.xlane.xlu0 %741
      %v743 = vsel %vm577, %v685, 0.0
      %744 = vadd.xlane.f32.xlu0 %v743
      %v745 = vpop.xlane.xlu0 %744
      %v746 = vsel %vm577, %v687, 0.0
      %747 = vadd.xlane.f32.xlu0 %v746
      %v748 = vpop.xlane.xlu0 %747
      %v749 = vsel %vm577, %v689, 0.0
      %750 = vadd.xlane.f32.xlu0 %v749
      %v751 = vpop.xlane.xlu0 %750
      %v752 = vsel %vm577, %v691, 0.0
      %753 = vadd.xlane.f32.xlu0 %v752
      %v754 = vpop.xlane.xlu0 %753
      %v755 = vsel %vm577, %v693, 0.0
      %756 = vadd.xlane.f32.xlu0 %v755
      %v757 = vpop.xlane.xlu0 %756
      %v758 = vadd.f32 %v712, %v628
      %v759 = vadd.f32 %v715, %v628
      %v760 = vadd.f32 %v718, %v628
      %v761 = vadd.f32 %v721, %v628
      %v762 = vadd.f32 %v724, %v628
      %v763 = vadd.f32 %v727, %v628
      %v764 = vadd.f32 %v730, %v628
      %v765 = vadd.f32 %v733, %v628
      %v766 = vadd.f32 %v736, %v628
      %v767 = vadd.f32 %v739, %v628
      %v768 = vadd.f32 %v742, %v628
      %v769 = vadd.f32 %v745, %v628
      %v770 = vadd.f32 %v748, %v628
      %v771 = vadd.f32 %v751, %v628
      %v772 = vadd.f32 %v754, %v628
      %v773 = vadd.f32 %v757, %v628
      %790 = vrot.lane.b32.xlu0 %v758, 127
      %v791 = vpop.permute.xlu0 %790
      %792 = vrot.lane.b32.xlu0 %v759, 127
      %v793 = vpop.permute.xlu0 %792
      %794 = vrot.lane.b32.xlu0 %v760, 127
      %v795 = vpop.permute.xlu0 %794
      %796 = vrot.lane.b32.xlu0 %v761, 127
      %v797 = vpop.permute.xlu0 %796
      %798 = vrot.lane.b32.xlu0 %v762, 127
      %v799 = vpop.permute.xlu0 %798
      %800 = vrot.lane.b32.xlu0 %v763, 127
      %v801 = vpop.permute.xlu0 %800
      %802 = vrot.lane.b32.xlu0 %v764, 127
      %v803 = vpop.permute.xlu0 %802
      %804 = vrot.lane.b32.xlu0 %v765, 127
      %v805 = vpop.permute.xlu0 %804
      %806 = vrot.lane.b32.xlu0 %v766, 127
      %v807 = vpop.permute.xlu0 %806
      %808 = vrot.lane.b32.xlu0 %v767, 127
      %v809 = vpop.permute.xlu0 %808
      %810 = vrot.lane.b32.xlu0 %v768, 127
      %v811 = vpop.permute.xlu0 %810
      %812 = vrot.lane.b32.xlu0 %v769, 127
      %v813 = vpop.permute.xlu0 %812
      %814 = vrot.lane.b32.xlu0 %v770, 127
      %v815 = vpop.permute.xlu0 %814
      %816 = vrot.lane.b32.xlu0 %v771, 127
      %v817 = vpop.permute.xlu0 %816
      %818 = vrot.lane.b32.xlu0 %v772, 127
      %v819 = vpop.permute.xlu0 %818
      %820 = vrot.lane.b32.xlu0 %v773, 127
      %v821 = vpop.permute.xlu0 %820
      %v838 = vmin.f32 %v630, %v791
      %v839 = vmin.f32 %v631, %v793
      %v840 = vmin.f32 %v632, %v795
      %v841 = vmin.f32 %v633, %v797
      %v842 = vmin.f32 %v634, %v799
      %v843 = vmin.f32 %v635, %v801
      %v844 = vmin.f32 %v636, %v803
      %v845 = vmin.f32 %v637, %v805
      %v846 = vmin.f32 %v638, %v807
      %v847 = vmin.f32 %v639, %v809
      %v848 = vmin.f32 %v640, %v811
      %v849 = vmin.f32 %v641, %v813
      %v850 = vmin.f32 %v642, %v815
      %v851 = vmin.f32 %v643, %v817
      %v852 = vmin.f32 %v644, %v819
      %v853 = vmin.f32 %v645, %v821
      %v854 = vxor.u32 %v838, 2147483648
      %v855 = vxor.u32 %v839, 2147483648
      %v856 = vxor.u32 %v840, 2147483648
      %v857 = vxor.u32 %v841, 2147483648
      %v858 = vxor.u32 %v842, 2147483648
      %v859 = vxor.u32 %v843, 2147483648
      %v860 = vxor.u32 %v844, 2147483648
      %v861 = vxor.u32 %v845, 2147483648
      %v862 = vxor.u32 %v846, 2147483648
      %v863 = vxor.u32 %v847, 2147483648
      %v864 = vxor.u32 %v848, 2147483648
      %v865 = vxor.u32 %v849, 2147483648
      %v866 = vxor.u32 %v850, 2147483648
      %v867 = vxor.u32 %v851, 2147483648
      %v868 = vxor.u32 %v852, 2147483648
      %v869 = vxor.u32 %v853, 2147483648
      %v870 = vmul.f32 %v854, 1.442695
      %v871 = vpow.pop %v870
      %v872 = vmul.f32 %v855, 1.442695
      %v873 = vpow.pop %v872
      %v874 = vmul.f32 %v856, 1.442695
      %v875 = vpow.pop %v874
      %v876 = vmul.f32 %v857, 1.442695
      %v877 = vpow.pop %v876
      %v878 = vmul.f32 %v858, 1.442695
      %v879 = vpow.pop %v878
      %v880 = vmul.f32 %v859, 1.442695
      %v881 = vpow.pop %v880
      %v882 = vmul.f32 %v860, 1.442695
      %v883 = vpow.pop %v882
      %v884 = vmul.f32 %v861, 1.442695
      %v885 = vpow.pop %v884
      %v886 = vmul.f32 %v862, 1.442695
      %v887 = vpow.pop %v886
      %v888 = vmul.f32 %v863, 1.442695
      %v889 = vpow.pop %v888
      %v890 = vmul.f32 %v864, 1.442695
      %v891 = vpow.pop %v890
      %v892 = vmul.f32 %v865, 1.442695
      %v893 = vpow.pop %v892
      %v894 = vmul.f32 %v866, 1.442695
      %v895 = vpow.pop %v894
      %v896 = vmul.f32 %v867, 1.442695
      %v897 = vpow.pop %v896
      %v898 = vmul.f32 %v868, 1.442695
      %v899 = vpow.pop %v898
      %v900 = vmul.f32 %v869, 1.442695
      %v901 = vpow.pop %v900
      %v902 = vadd.f32 %v871, 1.0
      %v903 = vadd.f32 %v873, 1.0
      %v904 = vadd.f32 %v875, 1.0
      %v905 = vadd.f32 %v877, 1.0
      %v906 = vadd.f32 %v879, 1.0
      %v907 = vadd.f32 %v881, 1.0
      %v908 = vadd.f32 %v883, 1.0
      %v909 = vadd.f32 %v885, 1.0
      %v910 = vadd.f32 %v887, 1.0
      %v911 = vadd.f32 %v889, 1.0
      %v912 = vadd.f32 %v891, 1.0
      %v913 = vadd.f32 %v893, 1.0
      %v914 = vadd.f32 %v895, 1.0
      %v915 = vadd.f32 %v897, 1.0
      %v916 = vadd.f32 %v899, 1.0
      %v917 = vadd.f32 %v901, 1.0
      %v918 = vrcp.pop %v902
      %v919 = vmul.f32 %v902, %v918
      %v920 = vsub.f32 1.0, %v919
      %v921 = vmul.f32 %v918, %v920
      %v922 = vadd.f32 %v918, %v921
      %vm923 = vweird.f32 %v902
      %vm924 = vweird.f32 %v918
      %vm925 = vmor %vm923, %vm924
      %v926 = vsel %vm925, %v918, %v922
      %v927 = vand.u32 2147483647, %v902
      %vm928 = vcmp.eq.f32.partialorder %v927, 8.507059e+37
      %v929 = vand.u32 %v902, 2147483648
      %v930 = vor.u32 1.1754944e-38, %v929
      %v931 = vsel %vm928, %v930, %v926
      %v932 = vmul.f32 1.0, %v931
      %v933 = vrcp.pop %v903
      %v934 = vmul.f32 %v903, %v933
      %v935 = vsub.f32 1.0, %v934
      %v936 = vmul.f32 %v933, %v935
      %v937 = vadd.f32 %v933, %v936
      %vm938 = vweird.f32 %v903
      %vm939 = vweird.f32 %v933
      %vm940 = vmor %vm938, %vm939
      %v941 = vsel %vm940, %v933, %v937
      %v942 = vand.u32 2147483647, %v903
      %vm943 = vcmp.eq.f32.partialorder %v942, 8.507059e+37
      %v944 = vand.u32 %v903, 2147483648
      %v945 = vor.u32 1.1754944e-38, %v944
      %v946 = vsel %vm943, %v945, %v941
      %v947 = vmul.f32 1.0, %v946
      %v948 = vrcp.pop %v904
      %v949 = vmul.f32 %v904, %v948
      %v950 = vsub.f32 1.0, %v949
      %v951 = vmul.f32 %v948, %v950
      %v952 = vadd.f32 %v948, %v951
      %vm953 = vweird.f32 %v904
      %vm954 = vweird.f32 %v948
      %vm955 = vmor %vm953, %vm954
      %v956 = vsel %vm955, %v948, %v952
      %v957 = vand.u32 2147483647, %v904
      %vm958 = vcmp.eq.f32.partialorder %v957, 8.507059e+37
      %v959 = vand.u32 %v904, 2147483648
      %v960 = vor.u32 1.1754944e-38, %v959
      %v961 = vsel %vm958, %v960, %v956
      %v962 = vmul.f32 1.0, %v961
      %v963 = vrcp.pop %v905
      %v964 = vmul.f32 %v905, %v963
      %v965 = vsub.f32 1.0, %v964
      %v966 = vmul.f32 %v963, %v965
      %v967 = vadd.f32 %v963, %v966
      %vm968 = vweird.f32 %v905
      %vm969 = vweird.f32 %v963
      %vm970 = vmor %vm968, %vm969
      %v971 = vsel %vm970, %v963, %v967
      %v972 = vand.u32 2147483647, %v905
      %vm973 = vcmp.eq.f32.partialorder %v972, 8.507059e+37
      %v974 = vand.u32 %v905, 2147483648
      %v975 = vor.u32 1.1754944e-38, %v974
      %v976 = vsel %vm973, %v975, %v971
      %v977 = vmul.f32 1.0, %v976
      %v978 = vrcp.pop %v906
      %v979 = vmul.f32 %v906, %v978
      %v980 = vsub.f32 1.0, %v979
      %v981 = vmul.f32 %v978, %v980
      %v982 = vadd.f32 %v978, %v981
      %vm983 = vweird.f32 %v906
      %vm984 = vweird.f32 %v978
      %vm985 = vmor %vm983, %vm984
      %v986 = vsel %vm985, %v978, %v982
      %v987 = vand.u32 2147483647, %v906
      %vm988 = vcmp.eq.f32.partialorder %v987, 8.507059e+37
      %v989 = vand.u32 %v906, 2147483648
      %v990 = vor.u32 1.1754944e-38, %v989
      %v991 = vsel %vm988, %v990, %v986
      %v992 = vmul.f32 1.0, %v991
      %v993 = vrcp.pop %v907
      %v994 = vmul.f32 %v907, %v993
      %v995 = vsub.f32 1.0, %v994
      %v996 = vmul.f32 %v993, %v995
      %v997 = vadd.f32 %v993, %v996
      %vm998 = vweird.f32 %v907
      %vm999 = vweird.f32 %v993
      %vm1000 = vmor %vm998, %vm999
      %v1001 = vsel %vm1000, %v993, %v997
      %v1002 = vand.u32 2147483647, %v907
      %vm1003 = vcmp.eq.f32.partialorder %v1002, 8.507059e+37
      %v1004 = vand.u32 %v907, 2147483648
      %v1005 = vor.u32 1.1754944e-38, %v1004
      %v1006 = vsel %vm1003, %v1005, %v1001
      %v1007 = vmul.f32 1.0, %v1006
      %v1008 = vrcp.pop %v908
      %v1009 = vmul.f32 %v908, %v1008
      %v1010 = vsub.f32 1.0, %v1009
      %v1011 = vmul.f32 %v1008, %v1010
      %v1012 = vadd.f32 %v1008, %v1011
      %vm1013 = vweird.f32 %v908
      %vm1014 = vweird.f32 %v1008
      %vm1015 = vmor %vm1013, %vm1014
      %v1016 = vsel %vm1015, %v1008, %v1012
      %v1017 = vand.u32 2147483647, %v908
      %vm1018 = vcmp.eq.f32.partialorder %v1017, 8.507059e+37
      %v1019 = vand.u32 %v908, 2147483648
      %v1020 = vor.u32 1.1754944e-38, %v1019
      %v1021 = vsel %vm1018, %v1020, %v1016
      %v1022 = vmul.f32 1.0, %v1021
      %v1023 = vrcp.pop %v909
      %v1024 = vmul.f32 %v909, %v1023
      %v1025 = vsub.f32 1.0, %v1024
      %v1026 = vmul.f32 %v1023, %v1025
      %v1027 = vadd.f32 %v1023, %v1026
      %vm1028 = vweird.f32 %v909
      %vm1029 = vweird.f32 %v1023
      %vm1030 = vmor %vm1028, %vm1029
      %v1031 = vsel %vm1030, %v1023, %v1027
      %v1032 = vand.u32 2147483647, %v909
      %vm1033 = vcmp.eq.f32.partialorder %v1032, 8.507059e+37
      %v1034 = vand.u32 %v909, 2147483648
      %v1035 = vor.u32 1.1754944e-38, %v1034
      %v1036 = vsel %vm1033, %v1035, %v1031
      %v1037 = vmul.f32 1.0, %v1036
      %v1038 = vrcp.pop %v910
      %v1039 = vmul.f32 %v910, %v1038
      %v1040 = vsub.f32 1.0, %v1039
      %v1041 = vmul.f32 %v1038, %v1040
      %v1042 = vadd.f32 %v1038, %v1041
      %vm1043 = vweird.f32 %v910
      %vm1044 = vweird.f32 %v1038
      %vm1045 = vmor %vm1043, %vm1044
      %v1046 = vsel %vm1045, %v1038, %v1042
      %v1047 = vand.u32 2147483647, %v910
      %vm1048 = vcmp.eq.f32.partialorder %v1047, 8.507059e+37
      %v1049 = vand.u32 %v910, 2147483648
      %v1050 = vor.u32 1.1754944e-38, %v1049
      %v1051 = vsel %vm1048, %v1050, %v1046
      %v1052 = vmul.f32 1.0, %v1051
      %v1053 = vrcp.pop %v911
      %v1054 = vmul.f32 %v911, %v1053
      %v1055 = vsub.f32 1.0, %v1054
      %v1056 = vmul.f32 %v1053, %v1055
      %v1057 = vadd.f32 %v1053, %v1056
      %vm1058 = vweird.f32 %v911
      %vm1059 = vweird.f32 %v1053
      %vm1060 = vmor %vm1058, %vm1059
      %v1061 = vsel %vm1060, %v1053, %v1057
      %v1062 = vand.u32 2147483647, %v911
      %vm1063 = vcmp.eq.f32.partialorder %v1062, 8.507059e+37
      %v1064 = vand.u32 %v911, 2147483648
      %v1065 = vor.u32 1.1754944e-38, %v1064
      %v1066 = vsel %vm1063, %v1065, %v1061
      %v1067 = vmul.f32 1.0, %v1066
      %v1068 = vrcp.pop %v912
      %v1069 = vmul.f32 %v912, %v1068
      %v1070 = vsub.f32 1.0, %v1069
      %v1071 = vmul.f32 %v1068, %v1070
      %v1072 = vadd.f32 %v1068, %v1071
      %vm1073 = vweird.f32 %v912
      %vm1074 = vweird.f32 %v1068
      %vm1075 = vmor %vm1073, %vm1074
      %v1076 = vsel %vm1075, %v1068, %v1072
      %v1077 = vand.u32 2147483647, %v912
      %vm1078 = vcmp.eq.f32.partialorder %v1077, 8.507059e+37
      %v1079 = vand.u32 %v912, 2147483648
      %v1080 = vor.u32 1.1754944e-38, %v1079
      %v1081 = vsel %vm1078, %v1080, %v1076
      %v1082 = vmul.f32 1.0, %v1081
      %v1083 = vrcp.pop %v913
      %v1084 = vmul.f32 %v913, %v1083
      %v1085 = vsub.f32 1.0, %v1084
      %v1086 = vmul.f32 %v1083, %v1085
      %v1087 = vadd.f32 %v1083, %v1086
      %vm1088 = vweird.f32 %v913
      %vm1089 = vweird.f32 %v1083
      %vm1090 = vmor %vm1088, %vm1089
      %v1091 = vsel %vm1090, %v1083, %v1087
      %v1092 = vand.u32 2147483647, %v913
      %vm1093 = vcmp.eq.f32.partialorder %v1092, 8.507059e+37
      %v1094 = vand.u32 %v913, 2147483648
      %v1095 = vor.u32 1.1754944e-38, %v1094
      %v1096 = vsel %vm1093, %v1095, %v1091
      %v1097 = vmul.f32 1.0, %v1096
      %v1098 = vrcp.pop %v914
      %v1099 = vmul.f32 %v914, %v1098
      %v1100 = vsub.f32 1.0, %v1099
      %v1101 = vmul.f32 %v1098, %v1100
      %v1102 = vadd.f32 %v1098, %v1101
      %vm1103 = vweird.f32 %v914
      %vm1104 = vweird.f32 %v1098
      %vm1105 = vmor %vm1103, %vm1104
      %v1106 = vsel %vm1105, %v1098, %v1102
      %v1107 = vand.u32 2147483647, %v914
      %vm1108 = vcmp.eq.f32.partialorder %v1107, 8.507059e+37
      %v1109 = vand.u32 %v914, 2147483648
      %v1110 = vor.u32 1.1754944e-38, %v1109
      %v1111 = vsel %vm1108, %v1110, %v1106
      %v1112 = vmul.f32 1.0, %v1111
      %v1113 = vrcp.pop %v915
      %v1114 = vmul.f32 %v915, %v1113
      %v1115 = vsub.f32 1.0, %v1114
      %v1116 = vmul.f32 %v1113, %v1115
      %v1117 = vadd.f32 %v1113, %v1116
      %vm1118 = vweird.f32 %v915
      %vm1119 = vweird.f32 %v1113
      %vm1120 = vmor %vm1118, %vm1119
      %v1121 = vsel %vm1120, %v1113, %v1117
      %v1122 = vand.u32 2147483647, %v915
      %vm1123 = vcmp.eq.f32.partialorder %v1122, 8.507059e+37
      %v1124 = vand.u32 %v915, 2147483648
      %v1125 = vor.u32 1.1754944e-38, %v1124
      %v1126 = vsel %vm1123, %v1125, %v1121
      %v1127 = vmul.f32 1.0, %v1126
      %v1128 = vrcp.pop %v916
      %v1129 = vmul.f32 %v916, %v1128
      %v1130 = vsub.f32 1.0, %v1129
      %v1131 = vmul.f32 %v1128, %v1130
      %v1132 = vadd.f32 %v1128, %v1131
      %vm1133 = vweird.f32 %v916
      %vm1134 = vweird.f32 %v1128
      %vm1135 = vmor %vm1133, %vm1134
      %v1136 = vsel %vm1135, %v1128, %v1132
      %v1137 = vand.u32 2147483647, %v916
      %vm1138 = vcmp.eq.f32.partialorder %v1137, 8.507059e+37
      %v1139 = vand.u32 %v916, 2147483648
      %v1140 = vor.u32 1.1754944e-38, %v1139
      %v1141 = vsel %vm1138, %v1140, %v1136
      %v1142 = vmul.f32 1.0, %v1141
      %v1143 = vrcp.pop %v917
      %v1144 = vmul.f32 %v917, %v1143
      %v1145 = vsub.f32 1.0, %v1144
      %v1146 = vmul.f32 %v1143, %v1145
      %v1147 = vadd.f32 %v1143, %v1146
      %vm1148 = vweird.f32 %v917
      %vm1149 = vweird.f32 %v1143
      %vm1150 = vmor %vm1148, %vm1149
      %v1151 = vsel %vm1150, %v1143, %v1147
      %v1152 = vand.u32 2147483647, %v917
      %vm1153 = vcmp.eq.f32.partialorder %v1152, 8.507059e+37
      %v1154 = vand.u32 %v917, 2147483648
      %v1155 = vor.u32 1.1754944e-38, %v1154
      %v1156 = vsel %vm1153, %v1155, %v1151
      %v1157 = vmul.f32 1.0, %v1156
      %vm1158 = vcmask 7168
      %1159 = vst.msk [vmem:[%s302] sm:$0xff] %vm1158, %v932
      %1160 = vst.msk [vmem:[%s302 + $0x8] sm:$0xff] %vm1158, %v947
      %1161 = vst.msk [vmem:[%s302 + $0x10] sm:$0xff] %vm1158, %v962
      %1162 = vst.msk [vmem:[%s302 + $0x18] sm:$0xff] %vm1158, %v977
      %1163 = vst.msk [vmem:[%s302 + $0x20] sm:$0xff] %vm1158, %v992
      %1164 = vst.msk [vmem:[%s302 + $0x28] sm:$0xff] %vm1158, %v1007
      %1165 = vst.msk [vmem:[%s302 + $0x30] sm:$0xff] %vm1158, %v1022
      %1166 = vst.msk [vmem:[%s302 + $0x38] sm:$0xff] %vm1158, %v1037
      %1167 = vst.msk [vmem:[%s302 + $0x40] sm:$0xff] %vm1158, %v1052
      %1168 = vst.msk [vmem:[%s302 + $0x48] sm:$0xff] %vm1158, %v1067
      %1169 = vst.msk [vmem:[%s302 + $0x50] sm:$0xff] %vm1158, %v1082
      %1170 = vst.msk [vmem:[%s302 + $0x58] sm:$0xff] %vm1158, %v1097
      %1171 = vst.msk [vmem:[%s302 + $0x60] sm:$0xff] %vm1158, %v1112
      %1172 = vst.msk [vmem:[%s302 + $0x68] sm:$0xff] %vm1158, %v1127
      %1173 = vst.msk [vmem:[%s302 + $0x70] sm:$0xff] %vm1158, %v1142
      %1174 = vst.msk [vmem:[%s302 + $0x78] sm:$0xff] %vm1158, %v1157
      %s1175 = smul.u32 16, %s18
      %p1176 = scmp.lt.s32.totalorder %s1175, 31
      %s1177 = scalar_select %p1176, %s1175, 31
      %s1178 = smul.addr %s1177, 8
      %s1179 = scalar_lea.vmem %s7, %s1178
      // Predicated region
      $region49: #{tpu_custom_call.1} parent=47 // pred_check
        %p1180 = pneg %p193
      $region50: #{tpu_custom_call.1} parent=47 // pred_check_branch
        %1182 = sbr.rel (%p1180) target = $region52
      $region51: #{tpu_custom_call.1} parent=47 // pred_region
        %s1183 = smul.u32 16, %s18
      $region52: #{tpu_custom_call.1} parent=47 // pred_fallthru
        _
    $region48: #{tpu_custom_call.1} parent=5 // pred_fallthru
      _
    %p1184 = scmp.le.s32.totalorder 2, %s13
    // Predicated region
    $region53: #{tpu_custom_call.1} parent=5 // pred_check
      %p1185 = pneg %p1184
    $region54: #{tpu_custom_call.1} parent=5 // pred_check_branch
      %1187 = sbr.rel (%p1185) target = $region56
    $region55: #{tpu_custom_call.1} parent=5 // pred_region
      %s1188 = ssub.s32 %s13, 2
      // Predicated region
      $region57: #{tpu_custom_call.1} parent=55 // pred_check
        %p1189 = pneg %p199
      $region58: #{tpu_custom_call.1} parent=55 // pred_check_branch
        %1191 = sbr.rel (%p1189) target = $region60
      $region59: #{tpu_custom_call.1} parent=55 // pred_region
        %s1192 = smul.u32 16, %s19
        %p1193 = scmp.lt.s32.totalorder %s1192, 31
        %s1194 = scalar_select %p1193, %s1192, 31
        %s1195 = smul.addr %s1194, 8
        %s1196 = scalar_lea.vmem %s7, %s1195
      $region60: #{tpu_custom_call.1} parent=55 // pred_fallthru
        _
    $region56: #{tpu_custom_call.1} parent=5 // pred_fallthru
      _
  $region6: #{tpu_custom_call.1} parent=0 // loop_footer
    %s17 = sadd.s32 1, %s13
  $region7: #{tpu_custom_call.1} parent=0 // loop_footer_branch
    %12 = sbr.rel target = $region3
  $region8: #{tpu_custom_call.1} parent=0 // loop_exit
    _

</llo_original>
